<compile_context>
chip_gen: v5e
topology: v5e:2x2
jax: 0.10.0
libtpu: 0.0.40
codegen_flags: <defaults>
</compile_context>

<pallas_src>
import functools

import jax
import jax.numpy as jnp
from jax import lax
from jax.experimental import pallas as pl
from jax.experimental.pallas import tpu as pltpu

BN_EPS = 1e-5


def _conv_stats_kernel(x_ref, w_ref, conv_ref, sum_ref, sumsq_ref):
    """Pass 1: one im2col matmul per row tile + per-channel stats accumulation."""
    # Single MXU matmul: (tm, K*C_in) @ (K*C_in, C_out), f32 accumulation.
    conv = jnp.dot(x_ref[...], w_ref[...], preferred_element_type=jnp.float32)
    conv_ref[...] = conv

    # sum / sumsq use the same output block for every grid step -> VMEM resident.
    @pl.when(pl.program_id(0) == 0)
    def _():
        sum_ref[...] = jnp.zeros_like(sum_ref)
        sumsq_ref[...] = jnp.zeros_like(sumsq_ref)

    sum_ref[...] += jnp.sum(conv, axis=0, keepdims=True)
    # f32 accumulators; conv values are O(1) so E[x^2]-E[x]^2 stays well conditioned.
    sumsq_ref[...] += jnp.sum(conv * conv, axis=0, keepdims=True)


def _bn_relu_kernel(inv_count, conv_ref, sum_ref, sumsq_ref, g_ref, b_ref, o_ref):
    """Pass 2: fused BatchNorm (scale/shift) + ReLU on one row tile."""
    mean = sum_ref[...] * inv_count                                     # (1, C_out)
    var = jnp.maximum(sumsq_ref[...] * inv_count - mean * mean, 0.0)    # biased var
    scale = g_ref[...] * lax.rsqrt(var + BN_EPS)                        # rsqrt -> EUP
    shift = b_ref[...] - mean * scale
    # One fused mul-add per element, then ReLU.  Dropout(p=0) is the identity.
    # TODO(synk): for p > 0 add pltpu.prng_seed/prng_random_bits dropout masking here.
    o_ref[...] = jnp.maximum(conv_ref[...] * scale + shift, 0.0).astype(o_ref.dtype)


def cnn_forward(x, weight, bias, gamma, beta, padding, *,
                row_tile=256, mxu_dtype=jnp.bfloat16):
    """ReLU(BatchNorm1d(Conv1d(x))) with Dropout(p=0) identity.

    x: (N, C_in, L) f32 (PyTorch NCL); weight: (C_out, C_in, K); returns (N, C_out, L_out).
    `bias` is accepted for API parity but unused: a per-channel constant added
    before training-mode BatchNorm is cancelled exactly by the mean subtraction.
    """
    del bias
    N, C_in, L = x.shape
    C_out, _, K = weight.shape
    L_pad = L + 2 * padding
    L_out = L_pad - K + 1
    M = N * L_out                      # rows of the im2col matmul
    KC = K * C_in                      # contraction size

    # ---- im2col in the wrapper: one (M, KC) x (KC, C_out) matmul ----
    x_nlc = jnp.transpose(jnp.pad(x, ((0, 0), (0, 0), (padding, padding))), (0, 2, 1))
    windows = jnp.stack([x_nlc[:, k:k + L_out, :] for k in range(K)], axis=2)
    x2d = windows.reshape(M, KC)                                   # cols ordered (k, ci)
    w2d = jnp.transpose(weight, (2, 1, 0)).reshape(KC, C_out)      # rows ordered (k, ci)

    # Row tiling (sublane aligned; 16 for bf16 packing).  Zero-padded rows have
    # conv == 0 so they contribute nothing to sum/sumsq; sliced off at the end.
    sub = 16 if mxu_dtype == jnp.bfloat16 else 8
    m_ceil = pl.cdiv(M, sub) * sub
    tm = min(max(row_tile // sub, 1) * sub, m_ceil)
    m_pad = pl.cdiv(M, tm) * tm
    x2d = jnp.pad(x2d, ((0, m_pad - M), (0, 0)))
    grid = (m_pad // tm,)

    # bf16 MXU operands, f32 accumulation; BN statistics and elementwise math in f32.
    x2d = x2d.astype(mxu_dtype)
    w2d = w2d.astype(mxu_dtype)

    # Per-step working set (double-buffered tiles) is tiny here; explicit limit
    # keeps us well inside v7x's 64 MiB physical VMEM at production tile sizes.
    vmem_limit = 32 * 1024 * 1024

    # ---- pass 1: conv tiles + per-channel sum / sum-of-squares ----
    conv, ch_sum, ch_sumsq = pl.pallas_call(
        _conv_stats_kernel,
        out_shape=(jax.ShapeDtypeStruct((m_pad, C_out), jnp.float32),
                   jax.ShapeDtypeStruct((1, C_out), jnp.float32),
                   jax.ShapeDtypeStruct((1, C_out), jnp.float32)),
        grid=grid,
        in_specs=[
            pl.BlockSpec((tm, KC), lambda i: (i, 0)),
            pl.BlockSpec((KC, C_out), lambda i: (0, 0)),
        ],
        out_specs=(
            pl.BlockSpec((tm, C_out), lambda i: (i, 0)),
            pl.BlockSpec((1, C_out), lambda i: (0, 0)),   # accumulator (resident)
            pl.BlockSpec((1, C_out), lambda i: (0, 0)),   # accumulator (resident)
        ),
        compiler_params=pltpu.CompilerParams(
            dimension_semantics=("arbitrary",),           # stats accumulate across steps
            vmem_limit_bytes=vmem_limit),
    )(x2d, w2d)

    # ---- pass 2: fused BatchNorm + ReLU, independent row tiles ----
    out2d = pl.pallas_call(
        functools.partial(_bn_relu_kernel, 1.0 / M),
        out_shape=jax.ShapeDtypeStruct((m_pad, C_out), x.dtype),
        grid=grid,
        in_specs=[
            pl.BlockSpec((tm, C_out), lambda i: (i, 0)),
            pl.BlockSpec((1, C_out), lambda i: (0, 0)),
            pl.BlockSpec((1, C_out), lambda i: (0, 0)),
            pl.BlockSpec((1, C_out), lambda i: (0, 0)),
            pl.BlockSpec((1, C_out), lambda i: (0, 0)),
        ],
        out_specs=pl.BlockSpec((tm, C_out), lambda i: (i, 0)),
        compiler_params=pltpu.CompilerParams(
            dimension_semantics=("parallel",),            # megacore-shardable on v7x
            vmem_limit_bytes=vmem_limit),
    )(conv, ch_sum, ch_sumsq,
      gamma.reshape(1, C_out).astype(jnp.float32),
      beta.reshape(1, C_out).astype(jnp.float32))

    return jnp.transpose(out2d[:M].reshape(N, L_out, C_out), (0, 2, 1))   # back to NCL


def _reference(x, weight, bias, gamma, beta, padding):
    """Pure-JAX f32 reference: Conv1d -> BatchNorm1d(train) -> ReLU -> Dropout(p=0)."""
    y = lax.conv_general_dilated(
        x, weight, window_strides=(1,), padding=[(padding, padding)],
        dimension_numbers=("NCH", "OIH", "NCH"))
    y = y + bias[None, :, None]
    mean = jnp.mean(y, axis=(0, 2), keepdims=True)
    var = jnp.mean(jnp.square(y - mean), axis=(0, 2), keepdims=True)   # biased var
    y = (y - mean) * lax.rsqrt(var + BN_EPS) * gamma[None, :, None] + beta[None, :, None]
    return jnp.maximum(y, 0.0)


if __name__ == "__main__":
    # Small deterministic example consistent with the module:
    # in_channel=4, out_channel=8, kernel_size=3, padding=1, p=0.
    N, C_IN, C_OUT, L, K, PAD = 2, 4, 8, 16, 3, 1

    key = jax.random.PRNGKey(0)
    kx, kw = jax.random.split(key)
    x = jax.random.normal(kx, (N, C_IN, L), jnp.float32)

    # reset_parameters(): xavier_uniform_ on Conv1d weight, zeros bias.
    fan_in, fan_out = C_IN * K, C_OUT * K
    bound = (6.0 / (fan_in + fan_out)) ** 0.5
    weight = jax.random.uniform(kw, (C_OUT, C_IN, K), jnp.float32, -bound, bound)
    bias = jnp.zeros((C_OUT,), jnp.float32)
    # BatchNorm1d default affine params.
    gamma = jnp.ones((C_OUT,), jnp.float32)
    beta = jnp.zeros((C_OUT,), jnp.float32)

    # row_tile=16 gives a multi-step grid even at this toy size (M = N*L_out = 32).
    out = jax.block_until_ready(
        cnn_forward(x, weight, bias, gamma, beta, PAD, row_tile=16))
    ref = _reference(x, weight, bias, gamma, beta, PAD)

    assert out.shape == (N, C_OUT, L), out.shape
    assert bool(jnp.all(jnp.isfinite(out))) and bool(jnp.all(out >= 0.0))
    # bf16 MXU operands (f32 accumulation) -> loose tolerance vs. full-f32 reference.
    assert bool(jnp.allclose(out, ref, rtol=3e-2, atol=3e-2)), \
        float(jnp.max(jnp.abs(out - ref)))
    print("KERNEL_OK")
</pallas_src>

<mosaic_0001>
module attributes {stable_mosaic.version = 11 : i64} {
  func.func @_conv_stats_kernel(%arg0: i32, %arg1: memref<16x12xbf16, #tpu.memory_space<vmem>>, %arg2: memref<12x8xbf16, #tpu.memory_space<vmem>>, %arg3: memref<16x8xf32, #tpu.memory_space<vmem>>, %arg4: memref<1x8xf32, #tpu.memory_space<vmem>>, %arg5: memref<1x8xf32, #tpu.memory_space<vmem>>) attributes {dimension_semantics = [#tpu.dimension_semantics<arbitrary>], iteration_bounds = array<i64: 2>, scalar_prefetch = 0 : i64, scratch_operands = 0 : i64, tpu.core_type = #tpu.core_type<tc>, window_params = [{transform_indices = @transform_0, window_bounds = array<i64: 16, 12>}, {pipeline_mode = #tpu.pipeline_mode<synchronous>, transform_indices = @transform_1, window_bounds = array<i64: 12, 8>}, {transform_indices = @transform_2, window_bounds = array<i64: 16, 8>}, {pipeline_mode = #tpu.pipeline_mode<synchronous>, transform_indices = @transform_3, window_bounds = array<i64: 1, 8>}, {pipeline_mode = #tpu.pipeline_mode<synchronous>, transform_indices = @transform_4, window_bounds = array<i64: 1, 8>}]} {
    %c0 = arith.constant 0 : index
    %c0_0 = arith.constant 0 : index
    %0 = vector.load %arg1[%c0, %c0_0] : memref<16x12xbf16, #tpu.memory_space<vmem>>, vector<16x12xbf16>
    %c0_1 = arith.constant 0 : index
    %c0_2 = arith.constant 0 : index
    %1 = vector.load %arg2[%c0_1, %c0_2] : memref<12x8xbf16, #tpu.memory_space<vmem>>, vector<12x8xbf16>
    %cst = arith.constant dense<0.000000e+00> : vector<16x8xf32>
    %2 = tpu.matmul %0, %1, %cst {dimension_numbers = #tpu.dot_dimension_numbers<[1], [0], [0], [1], [0, 0, 1, 1], [], []>} : vector<16x12xbf16>, vector<12x8xbf16>, vector<16x8xf32> -> vector<16x8xf32>
    %c0_3 = arith.constant 0 : index
    %c0_4 = arith.constant 0 : index
    %3 = vector.load %arg3[%c0_3, %c0_4] : memref<16x8xf32, #tpu.memory_space<vmem>>, vector<16x8xf32>
    tpu.vector_store %arg3[%c0_3, %c0_4], %2 {strides = array<i32>} : memref<16x8xf32, #tpu.memory_space<vmem>>, vector<16x8xf32>,
    %c0_i32 = arith.constant 0 : i32
    %4 = arith.cmpi eq, %arg0, %c0_i32 : i32
    %5 = arith.extui %4 : i1 to i32
    %c0_i32_5 = arith.constant 0 : i32
    %6 = arith.cmpi ne, %5, %c0_i32_5 : i32
    scf.if %6 {
      %cst_16 = arith.constant 0.000000e+00 : f32
      %18 = vector.broadcast %cst_16 : f32 to vector<1x8xf32>
      %c0_17 = arith.constant 0 : index
      %c0_18 = arith.constant 0 : index
      %19 = vector.load %arg4[%c0_17, %c0_18] : memref<1x8xf32, #tpu.memory_space<vmem>>, vector<1x8xf32>
      tpu.vector_store %arg4[%c0_17, %c0_18], %18 {strides = array<i32>} : memref<1x8xf32, #tpu.memory_space<vmem>>, vector<1x8xf32>,
      %cst_19 = arith.constant 0.000000e+00 : f32
      %20 = vector.broadcast %cst_19 : f32 to vector<1x8xf32>
      %c0_20 = arith.constant 0 : index
      %c0_21 = arith.constant 0 : index
      %21 = vector.load %arg5[%c0_20, %c0_21] : memref<1x8xf32, #tpu.memory_space<vmem>>, vector<1x8xf32>
      tpu.vector_store %arg5[%c0_20, %c0_21], %20 {strides = array<i32>} : memref<1x8xf32, #tpu.memory_space<vmem>>, vector<1x8xf32>,
    } else {
    }
    %c0_6 = arith.constant 0 : index
    %c0_7 = arith.constant 0 : index
    %7 = vector.load %arg4[%c0_6, %c0_7] : memref<1x8xf32, #tpu.memory_space<vmem>>, vector<1x8xf32>
    %cst_8 = arith.constant dense<0.000000e+00> : vector<8xf32>
    %8 = vector.multi_reduction <add>, %2, %cst_8 [0] : vector<16x8xf32> to vector<8xf32>
    %9 = vector.shape_cast %8 : vector<8xf32> to vector<1x8xf32>
    %10 = arith.addf %7, %9 : vector<1x8xf32>
    %c0_9 = arith.constant 0 : index
    %c0_10 = arith.constant 0 : index
    %11 = vector.load %arg4[%c0_9, %c0_10] : memref<1x8xf32, #tpu.memory_space<vmem>>, vector<1x8xf32>
    tpu.vector_store %arg4[%c0_9, %c0_10], %10 {strides = array<i32>} : memref<1x8xf32, #tpu.memory_space<vmem>>, vector<1x8xf32>,
    %c0_11 = arith.constant 0 : index
    %c0_12 = arith.constant 0 : index
    %12 = vector.load %arg5[%c0_11, %c0_12] : memref<1x8xf32, #tpu.memory_space<vmem>>, vector<1x8xf32>
    %13 = arith.mulf %2, %2 : vector<16x8xf32>
    %cst_13 = arith.constant dense<0.000000e+00> : vector<8xf32>
    %14 = vector.multi_reduction <add>, %13, %cst_13 [0] : vector<16x8xf32> to vector<8xf32>
    %15 = vector.shape_cast %14 : vector<8xf32> to vector<1x8xf32>
    %16 = arith.addf %12, %15 : vector<1x8xf32>
    %c0_14 = arith.constant 0 : index
    %c0_15 = arith.constant 0 : index
    %17 = vector.load %arg5[%c0_14, %c0_15] : memref<1x8xf32, #tpu.memory_space<vmem>>, vector<1x8xf32>
    tpu.vector_store %arg5[%c0_14, %c0_15], %16 {strides = array<i32>} : memref<1x8xf32, #tpu.memory_space<vmem>>, vector<1x8xf32>,
    return
  }
  func.func @transform_0(%arg0: i32) -> (i32, i32) {
    %c0_i32 = arith.constant 0 : i32
    %c0_i32_0 = arith.constant 0 : i32
    return %arg0, %c0_i32 : i32, i32
  }
  func.func @transform_1(%arg0: i32) -> (i32, i32) {
    %c0_i32 = arith.constant 0 : i32
    %c0_i32_0 = arith.constant 0 : i32
    %c0_i32_1 = arith.constant 0 : i32
    return %c0_i32, %c0_i32_0 : i32, i32
  }
  func.func @transform_2(%arg0: i32) -> (i32, i32) {
    %c0_i32 = arith.constant 0 : i32
    %c0_i32_0 = arith.constant 0 : i32
    return %arg0, %c0_i32 : i32, i32
  }
  func.func @transform_3(%arg0: i32) -> (i32, i32) {
    %c0_i32 = arith.constant 0 : i32
    %c0_i32_0 = arith.constant 0 : i32
    %c0_i32_1 = arith.constant 0 : i32
    return %c0_i32, %c0_i32_0 : i32, i32
  }
  func.func @transform_4(%arg0: i32) -> (i32, i32) {
    %c0_i32 = arith.constant 0 : i32
    %c0_i32_0 = arith.constant 0 : i32
    %c0_i32_1 = arith.constant 0 : i32
    return %c0_i32, %c0_i32_0 : i32, i32
  }
}

</mosaic_0001>

<llo_original>
// kernel: tpu_custom_call.1
$region0: #{tpu_custom_call.1}
  #allocation0 [shape = 'u32[]', space=smem, size = 0x4, offset = 0x4, fixed_abs, tag = 'smem constant byte address 0x4 - core index']
  #allocation1 [shape = 'u32[72,128]{1,0:T(1,128)}', space=vmem, size = 0x9000, scoped, tag = 'internal scratch']
  %s0 = inlined_call_operand.vmem [shape: bf16[32,12], index: 0, kind: input, shape index: {}]
  %s1 = inlined_call_operand.vmem [shape: bf16[12,8], index: 1, kind: input, shape index: {}]
  %s2 = inlined_call_operand.vmem [shape: f32[32,8], index: 2, kind: output, shape index: {0}]
  %s3 = inlined_call_operand.hbm [shape: f32[1,8], index: 3, kind: output, shape index: {1}]
  %s4 = inlined_call_operand.hbm [shape: f32[1,8], index: 4, kind: output, shape index: {2}]
  %5 = xla_tuple %s2, %s3, %s4
  %s6 = sld [smem:[#allocation0]]
  $region61: #{tpu_custom_call.1} parent=0
    _
  %s8 = ssub.s32 1, %s6
  %s9 = scalar_select 0, %s8, %s6
  $region1: #{tpu_custom_call.1} parent=0
    #allocation2 [shape = 'u8[512]{0}', space=vmem, size = 0x400, scoped, tag = 'output window, operand 1, single buffered']
    #allocation3 [shape = 's32[2]{0}', space=sflag, size = 0x8, scoped, tag = 'scoped memory for tpu_custom_call.1']
    #allocation4 [shape = 'u8[512]{0}', space=vmem, size = 0x400, scoped, tag = 'output window, operand 2, single buffered']
    #allocation5 [shape = 's32[1]{0}', space=sflag, size = 0x4, scoped, tag = 'scoped memory for tpu_custom_call.1']
    %10 = vsyncpa [#allocation3], 0
    %11 = vsyncpa [#allocation5], 0
    loop: start=0, step=1, limit=4
    $region2: #{tpu_custom_call.1} parent=1 // loop_pre_header
      _
    $region3: #{tpu_custom_call.1} parent=1 // loop_header
      %s13 = sphi 0, %s17
      %p14 = scmp.ge.s32.totalorder %s13, 4
      %s23 = sphi 0, %s25
      %s26 = sphi 0, %s23
      %s27 = sphi 0, %s26
      %s43 = sphi 0, %s27
      %s47 = sphi 0, %s47
      %s49 = sphi 0, %s47
      %s50 = sphi 0, %s49
      %s64 = sphi 0, %s50
      %s70 = sphi 0, %s72
      %s73 = sphi 0, %s70
      %s74 = sphi 0, %s73
      %s90 = sphi 0, %s74
      %s94 = sphi 0, %s94
      %s96 = sphi 0, %s94
      %s97 = sphi 0, %s96
      %s111 = sphi 0, %s97
      %s115 = sphi 0, %s115
      %s117 = sphi 0, %s115
      %s118 = sphi 0, %s117
      %s132 = sphi 0, %s118
    $region4: #{tpu_custom_call.1} parent=1 // loop_header_branch
      %16 = sbr.rel (%p14) target = $region8
    $region5: #{tpu_custom_call.1} parent=1 // loop_body
      %s18 = ssub.s32 %s13, 1
      %s19 = ssub.s32 %s13, 2
      %s20 = sadd.s32 %s13, 1
      %s21 = ssub.s32 %s13, %s20
      %p22 = scmp.eq.s32.totalorder %s21, 0
      %s24 = sadd.s32 %s23, 1
      %s25 = scalar_select %p22, %s23, %s24
      %p28 = pneg %p22
      %p29 = scmp.eq.s32.totalorder %s13, 1
      %p30 = por %p28, %p29
      %p31 = scmp.ne.s32.totalorder %s23, %s26
      %p32 = scmp.eq.s32.totalorder %s13, 0
      %p33 = por %p31, %p32
      %p34 = scmp.ne.s32.totalorder %s23, %s26
      %p35 = scmp.eq.s32.totalorder %s18, 1
      %p36 = por %p34, %p35
      %p37 = scmp.ne.s32.totalorder %s26, %s27
      %p38 = scmp.eq.s32.totalorder %s18, 0
      %p39 = por %p37, %p38
      %p40 = scmp.ne.s32.totalorder %s26, %s27
      %p41 = scmp.eq.s32.totalorder %s19, 1
      %p42 = por %p40, %p41
      %p44 = scmp.ne.s32.totalorder %s27, %s43
      %p45 = scmp.eq.s32.totalorder %s19, 0
      %p46 = por %p44, %p45
      %s48 = sadd.s32 %s47, 1
      %p51 = scmp.eq.s32.totalorder %s13, 1
      %p52 = scmp.ne.s32.totalorder %s47, %s49
      %p53 = scmp.eq.s32.totalorder %s13, 0
      %p54 = por %p52, %p53
      %p55 = scmp.ne.s32.totalorder %s47, %s49
      %p56 = scmp.eq.s32.totalorder %s18, 1
      %p57 = por %p55, %p56
      %p58 = scmp.ne.s32.totalorder %s49, %s50
      %p59 = scmp.eq.s32.totalorder %s18, 0
      %p60 = por %p58, %p59
      %p61 = scmp.ne.s32.totalorder %s49, %s50
      %p62 = scmp.eq.s32.totalorder %s19, 1
      %p63 = por %p61, %p62
      %p65 = scmp.ne.s32.totalorder %s50, %s64
      %p66 = scmp.eq.s32.totalorder %s19, 0
      %p67 = por %p65, %p66
      %s68 = ssub.s32 %s13, %s20
      %p69 = scmp.eq.s32.totalorder %s68, 0
      %s71 = sadd.s32 %s70, 1
      %s72 = scalar_select %p69, %s70, %s71
      %p75 = pneg %p69
      %p76 = scmp.eq.s32.totalorder %s13, 1
      %p77 = por %p75, %p76
      %p78 = scmp.ne.s32.totalorder %s70, %s73
      %p79 = scmp.eq.s32.totalorder %s13, 0
      %p80 = por %p78, %p79
      %p81 = scmp.ne.s32.totalorder %s70, %s73
      %p82 = scmp.eq.s32.totalorder %s18, 1
      %p83 = por %p81, %p82
      %p84 = scmp.ne.s32.totalorder %s73, %s74
      %p85 = scmp.eq.s32.totalorder %s18, 0
      %p86 = por %p84, %p85
      %p87 = scmp.ne.s32.totalorder %s73, %s74
      %p88 = scmp.eq.s32.totalorder %s19, 1
      %p89 = por %p87, %p88
      %p91 = scmp.ne.s32.totalorder %s74, %s90
      %p92 = scmp.eq.s32.totalorder %s19, 0
      %p93 = por %p91, %p92
      %s95 = sadd.s32 %s94, 1
      %p98 = scmp.eq.s32.totalorder %s13, 1
      %p99 = scmp.ne.s32.totalorder %s94, %s96
      %p100 = scmp.eq.s32.totalorder %s13, 0
      %p101 = por %p99, %p100
      %p102 = scmp.ne.s32.totalorder %s94, %s96
      %p103 = scmp.eq.s32.totalorder %s18, 1
      %p104 = por %p102, %p103
      %p105 = scmp.ne.s32.totalorder %s96, %s97
      %p106 = scmp.eq.s32.totalorder %s18, 0
      %p107 = por %p105, %p106
      %p108 = scmp.ne.s32.totalorder %s96, %s97
      %p109 = scmp.eq.s32.totalorder %s19, 1
      %p110 = por %p108, %p109
      %p112 = scmp.ne.s32.totalorder %s97, %s111
      %p113 = scmp.eq.s32.totalorder %s19, 0
      %p114 = por %p112, %p113
      %s116 = sadd.s32 %s115, 1
      %p119 = scmp.eq.s32.totalorder %s13, 1
      %p120 = scmp.ne.s32.totalorder %s115, %s117
      %p121 = scmp.eq.s32.totalorder %s13, 0
      %p122 = por %p120, %p121
      %p123 = scmp.ne.s32.totalorder %s115, %s117
      %p124 = scmp.eq.s32.totalorder %s18, 1
      %p125 = por %p123, %p124
      %p126 = scmp.ne.s32.totalorder %s117, %s118
      %p127 = scmp.eq.s32.totalorder %s18, 0
      %p128 = por %p126, %p127
      %p129 = scmp.ne.s32.totalorder %s117, %s118
      %p130 = scmp.eq.s32.totalorder %s19, 1
      %p131 = por %p129, %p130
      %p133 = scmp.ne.s32.totalorder %s118, %s132
      %p134 = scmp.eq.s32.totalorder %s19, 0
      %p135 = por %p133, %p134
      %p136 = scmp.le.s32.totalorder 1, %s13
      %p137 = scmp.lt.s32.totalorder %s13, 3
      %p138 = pnand %p136, %p137
      %p139 = pneg %p138
      // Predicated region
      $region9: #{tpu_custom_call.1} parent=5 // pred_check
        _
      $region10: #{tpu_custom_call.1} parent=5 // pred_check_branch
        %141 = sbr.rel (%p138) target = $region12
      $region11: #{tpu_custom_call.1} parent=5 // pred_region
        %s142 = ssub.s32 %s13, 1
        // Predicated region
        $region13: #{tpu_custom_call.1} parent=11 // pred_check
          %p143 = pneg %p60
        $region14: #{tpu_custom_call.1} parent=11 // pred_check_branch
          %145 = sbr.rel (%p143) target = $region16
        $region15: #{tpu_custom_call.1} parent=11 // pred_region
          _
        $region16: #{tpu_custom_call.1} parent=11 // pred_fallthru
          _
      $region12: #{tpu_custom_call.1} parent=5 // pred_fallthru
        _
      %p146 = scmp.lt.s32.totalorder %s13, 2
      // Predicated region
      $region17: #{tpu_custom_call.1} parent=5 // pred_check
        %p147 = pneg %p146
      $region18: #{tpu_custom_call.1} parent=5 // pred_check_branch
        %149 = sbr.rel (%p147) target = $region20
      $region19: #{tpu_custom_call.1} parent=5 // pred_region
        // Predicated region
        $region21: #{tpu_custom_call.1} parent=19 // pred_check
          %p150 = pneg %p33
        $region22: #{tpu_custom_call.1} parent=19 // pred_check_branch
          %152 = sbr.rel (%p150) target = $region24
        $region23: #{tpu_custom_call.1} parent=19 // pred_region
          %s153 = smul.u32 2, %s13
          %p154 = scmp.lt.s32.totalorder %s153, 3
          %s155 = scalar_select %p154, %s153, 3
          %s156 = smul.addr %s155, 4
          %s157 = scalar_lea.vmem %s0, %s156
          %s158 = smul.u32 2, %s13
        $region24: #{tpu_custom_call.1} parent=19 // pred_fallthru
          _
      $region20: #{tpu_custom_call.1} parent=5 // pred_fallthru
        _
      %p159 = scmp.le.s32.totalorder 1, %s13
      %p160 = scmp.lt.s32.totalorder %s13, 3
      %p161 = pnand %p159, %p160
      %p162 = pneg %p161
      // Predicated region
      $region25: #{tpu_custom_call.1} parent=5 // pred_check
        _
      $region26: #{tpu_custom_call.1} parent=5 // pred_check_branch
        %164 = sbr.rel (%p161) target = $region28
      $region27: #{tpu_custom_call.1} parent=5 // pred_region
        %s165 = ssub.s32 %s13, 1
        %s166 = smul.u32 2, %s18
        %p167 = scmp.lt.s32.totalorder %s166, 3
        %s168 = scalar_select %p167, %s166, 3
        %s169 = smul.addr %s168, 4
        %s170 = scalar_lea.vmem %s0, %s169
        %p171 = pneg %p39
        %p172 = pneg %p36
        %p173 = pneg %p60
        %p174 = pneg %p57
        %p175 = pneg %p86
        %p176 = pneg %p83
        %s177 = smul.u32 2, %s18
        %p178 = scmp.lt.s32.totalorder %s177, 3
        %s179 = scalar_select %p178, %s177, 3
        %s180 = smul.addr %s179, 8
        %s181 = scalar_lea.vmem %s2, %s180
        %p182 = pneg %p107
        %p183 = pneg %p104
        %p184 = pneg %p128
        %p185 = pneg %p125
        %s186 = smul.u32 2, %s18
        %p187 = scmp.lt.s32.totalorder %s186, 3
        %s188 = scalar_select %p187, %s186, 3
        %s189 = smul.addr %s188, 4
        %s190 = scalar_lea.vmem %s0, %s189
        %s191 = smul.u32 2, %s18
        %s192 = smul.u32 2, %s18
        %p193 = scmp.lt.s32.totalorder %s192, 3
        %s194 = scalar_select %p193, %s192, 3
        %s195 = smul.addr %s194, 8
        %s196 = scalar_lea.vmem %s2, %s195
        %s197 = smul.u32 2, %s18
        %v199 = vld [vmem:[%s190] sm:$0xf]
        %v200 = vld [vmem:[%s190 + $0x4] sm:$0xf]
        %v201 = vld [vmem:[%s1] sm:$0xf]
        %v202 = vld [vmem:[%s1 + $0x4] sm:$0x3]
        %v205 = vunpack.c.l.b16 %v199
        %v206 = vunpack.c.l.b16 %v200
        %v207 = vpack.c.b16 %v206, %v205
        %v210 = vunpack.c.l.b16 %v201
        %v211 = vunpack.c.l.b16 %v202
        %v212 = vpack.c.b16 %v211, %v210
        %vm213 = vcmask 97280
        %v215 = vsel %vm213, %v207, 0
        %vm217 = vcmask 1045504
        %v219 = vsel %vm217, %v212, 0
        %221 = vmatpush.bf16.msra.mxu0 0
        %222 = vmatpush.bf16.msra.mxu0 0
        %223 = vmatpush.bf16.msra.mxu0 0
        %224 = vmatpush.bf16.msra.mxu0 0
        %225 = vmatpush.bf16.msra.mxu0 0
        %226 = vmatpush.bf16.msra.mxu0 0
        %227 = vmatpush.bf16.msra.mxu0 0
        %228 = vmatpush.bf16.msra.mxu0 %v219
        %229 = vmatmul.bf16.gmra.mxu0 %v215
        %v230 = vpop.f32.mrf.mxu0
        %v231 = vadd.f32 0.0, %v230
        %v232 = vpop.f32.mrf.mxu0
        %v233 = vadd.f32 0.0, %v232
        %234 = vdwg.mxu0
        %vm235 = vcmask 64512
        %236 = vst.msk [vmem:[%s196] sm:$0xff] %vm235, %v231
        %237 = vst.msk [vmem:[%s196 + $0x8] sm:$0xff] %vm235, %v233
        %p238 = scmp.eq.s32.totalorder %s18, 0
        // Predicated region
        $region29: #{tpu_custom_call.1} parent=27 // pred_check
          %p239 = pneg %p238
        $region30: #{tpu_custom_call.1} parent=27 // pred_check_branch
          %241 = sbr.rel (%p239) target = $region32
        $region31: #{tpu_custom_call.1} parent=27 // pred_region
          %vm242 = vcmask 57344
          %243 = vst.msk [vmem:[#allocation2] sm:$0x1] %vm242, 0.0
          %244 = vst.msk [vmem:[#allocation4] sm:$0x1] %vm242, 0.0
        $region32: #{tpu_custom_call.1} parent=27 // pred_fallthru
          _
        %v245 = vld [vmem:[#allocation2] sm:$0x1]
        %v246 = vsel %vm235, %v231, 0.0
        %v247 = vsel %vm235, %v233, 0.0
        %v248 = vadd.f32 %v246, %v247
        %v249 = vrot.slane %v248, 4
        %v250 = vadd.f32 %v248, %v249
        %v251 = vrot.slane %v250, 2
        %v252 = vadd.f32 %v250, %v251
        %v253 = vrot.slane %v252, 1
        %v254 = vadd.f32 %v252, %v253
        %v255 = vadd.f32 %v245, %v254
        %vm256 = vcmask 57344
        %257 = vst.msk [vmem:[#allocation2] sm:$0x1] %vm256, %v255
        %v258 = vld [vmem:[#allocation4] sm:$0x1]
        %v259 = vmul.f32 %v231, %v231
        %v260 = vmul.f32 %v233, %v233
        %v261 = vsel %vm235, %v259, 0.0
        %v262 = vsel %vm235, %v260, 0.0
        %v263 = vadd.f32 %v261, %v262
        %v264 = vrot.slane %v263, 4
        %v265 = vadd.f32 %v263, %v264
        %v266 = vrot.slane %v265, 2
        %v267 = vadd.f32 %v265, %v266
        %v268 = vrot.slane %v267, 1
        %v269 = vadd.f32 %v267, %v268
        %v270 = vadd.f32 %v258, %v269
        %271 = vst.msk [vmem:[#allocation4] sm:$0x1] %vm256, %v270
        %s272 = smul.u32 2, %s18
        %p273 = scmp.lt.s32.totalorder %s272, 3
        %s274 = scalar_select %p273, %s272, 3
        %s275 = smul.addr %s274, 8
        %s276 = scalar_lea.vmem %s2, %s275
        // Predicated region
        $region33: #{tpu_custom_call.1} parent=27 // pred_check
          %p277 = pneg %p83
        $region34: #{tpu_custom_call.1} parent=27 // pred_check_branch
          %279 = sbr.rel (%p277) target = $region36
        $region35: #{tpu_custom_call.1} parent=27 // pred_region
          %s280 = smul.u32 2, %s18
        $region36: #{tpu_custom_call.1} parent=27 // pred_fallthru
          _
        // Predicated region
        $region37: #{tpu_custom_call.1} parent=27 // pred_check
          %p281 = pneg %p104
        $region38: #{tpu_custom_call.1} parent=27 // pred_check_branch
          %283 = sbr.rel (%p281) target = $region40
        $region39: #{tpu_custom_call.1} parent=27 // pred_region
          %285 = vsyncadd [#allocation3], 0
          %s287 = sshll.u32 [#allocation2], 4
          %s288 = int_to_ptr.vmem [resolvable:$true] %s287
          %s289 = sshll.u32 %s3, 4
          %s290 = int_to_ptr.hbm [resolvable:$true] %s289
          %292 = dma.vmem_to_hbm [thread:$0]  %s288, 16, %s290, [#allocation3]
        $region40: #{tpu_custom_call.1} parent=27 // pred_fallthru
          _
        // Predicated region
        $region41: #{tpu_custom_call.1} parent=27 // pred_check
          %p293 = pneg %p125
        $region42: #{tpu_custom_call.1} parent=27 // pred_check_branch
          %295 = sbr.rel (%p293) target = $region44
        $region43: #{tpu_custom_call.1} parent=27 // pred_region
          %297 = vsyncadd [#allocation5], 0
          %s299 = sshll.u32 [#allocation4], 4
          %s300 = int_to_ptr.vmem [resolvable:$true] %s299
          %s301 = sshll.u32 %s4, 4
          %s302 = int_to_ptr.hbm [resolvable:$true] %s301
          %304 = dma.vmem_to_hbm [thread:$0]  %s300, 16, %s302, [#allocation5]
        $region44: #{tpu_custom_call.1} parent=27 // pred_fallthru
          _
        // Predicated region
        $region45: #{tpu_custom_call.1} parent=27 // pred_check
          %p305 = pneg %p104
        $region46: #{tpu_custom_call.1} parent=27 // pred_check_branch
          %307 = sbr.rel (%p305) target = $region48
        $region47: #{tpu_custom_call.1} parent=27 // pred_region
          %309 = dma.done [#allocation3], 16
        $region48: #{tpu_custom_call.1} parent=27 // pred_fallthru
          _
        // Predicated region
        $region49: #{tpu_custom_call.1} parent=27 // pred_check
          %p310 = pneg %p125
        $region50: #{tpu_custom_call.1} parent=27 // pred_check_branch
          %312 = sbr.rel (%p310) target = $region52
        $region51: #{tpu_custom_call.1} parent=27 // pred_region
          %314 = dma.done [#allocation5], 16
        $region52: #{tpu_custom_call.1} parent=27 // pred_fallthru
          _
      $region28: #{tpu_custom_call.1} parent=5 // pred_fallthru
        _
      %p315 = scmp.le.s32.totalorder 2, %s13
      // Predicated region
      $region53: #{tpu_custom_call.1} parent=5 // pred_check
        %p316 = pneg %p315
      $region54: #{tpu_custom_call.1} parent=5 // pred_check_branch
        %318 = sbr.rel (%p316) target = $region56
      $region55: #{tpu_custom_call.1} parent=5 // pred_region
        %s319 = ssub.s32 %s13, 2
        // Predicated region
        $region57: #{tpu_custom_call.1} parent=55 // pred_check
          %p320 = pneg %p89
        $region58: #{tpu_custom_call.1} parent=55 // pred_check_branch
          %322 = sbr.rel (%p320) target = $region60
        $region59: #{tpu_custom_call.1} parent=55 // pred_region
          %s323 = smul.u32 2, %s19
          %p324 = scmp.lt.s32.totalorder %s323, 3
          %s325 = scalar_select %p324, %s323, 3
          %s326 = smul.addr %s325, 8
          %s327 = scalar_lea.vmem %s2, %s326
        $region60: #{tpu_custom_call.1} parent=55 // pred_fallthru
          _
      $region56: #{tpu_custom_call.1} parent=5 // pred_fallthru
        _
    $region6: #{tpu_custom_call.1} parent=1 // loop_footer
      %s17 = sadd.s32 1, %s13
    $region7: #{tpu_custom_call.1} parent=1 // loop_footer_branch
      %12 = sbr.rel target = $region3
    $region8: #{tpu_custom_call.1} parent=1 // loop_exit
      _
    %328 = vsyncpa [#allocation3], 1
    %s329 = scalar_lea.sflag [#allocation3], 1
    %330 = vsyncpa %s329, 1
    %331 = vsyncpa [#allocation5], 1

</llo_original>
